<compile_context>
chip_gen: v7x
topology: tpu7x:2x2x1
jax: 0.10.0
libtpu: 0.0.40
codegen_flags: <defaults>
</compile_context>

<pallas_src>
import functools

import jax
import jax.numpy as jnp
from jax import lax
from jax.experimental import pallas as pl
from jax.experimental.pallas import tpu as pltpu


def _region_loss_kernel(pred_ref, gt_ref, kobj_ref, cell_ref, anch_ref,
                        out_ref, *, nHW, thresh):
    # pred_ref: (R, 5*nHW), rows = (batch-in-tile, anchor); lane blocks = params
    xr = pred_ref[:, 0 * nHW:1 * nHW]
    yr = pred_ref[:, 1 * nHW:2 * nHW]
    wr = pred_ref[:, 2 * nHW:3 * nHW]
    hr = pred_ref[:, 3 * nHW:4 * nHW]
    cr = pred_ref[:, 4 * nHW:5 * nHW]

    cc = cell_ref[0:1, :]              # (1, nHW) cell column (k % nW)
    rr = cell_ref[1:2, :]              # (1, nHW) cell row    (k // nW)
    aw = anch_ref[:, 0:nHW]            # (R, nHW) anchor w per lane (torch layout)
    ah = anch_ref[:, nHW:2 * nHW]      # (R, nHW) anchor h per lane
    gx = gt_ref[:, 0:1]                # (R, 1) GT box per row (grid units)
    gy = gt_ref[:, 1:2]
    gw = gt_ref[:, 2:3]
    gh = gt_ref[:, 3:4]

    sig_x = jax.nn.sigmoid(xr)
    sig_y = jax.nn.sigmoid(yr)
    conf = jax.nn.sigmoid(cr)

    # decoded pred boxes (grid units, center format)
    px = sig_x + cc
    py = sig_y + rr
    pw = jnp.exp(wr) * aw
    ph = jnp.exp(hr) * ah

    # IoU of every pred box vs. the row's GT box (torch "+1" convention)
    b1_x1 = px - 0.5 * pw
    b1_x2 = px + 0.5 * pw
    b1_y1 = py - 0.5 * ph
    b1_y2 = py + 0.5 * ph
    b2_x1 = gx - 0.5 * gw
    b2_x2 = gx + 0.5 * gw
    b2_y1 = gy - 0.5 * gh
    b2_y2 = gy + 0.5 * gh
    iw = jnp.maximum(jnp.minimum(b1_x2, b2_x2) - jnp.maximum(b1_x1, b2_x1) + 1.0, 0.0)
    ih = jnp.maximum(jnp.minimum(b1_y2, b2_y2) - jnp.maximum(b1_y1, b2_y1) + 1.0, 0.0)
    inter = iw * ih
    a1 = (b1_x2 - b1_x1 + 1.0) * (b1_y2 - b1_y1 + 1.0)
    a2 = (b2_x2 - b2_x1 + 1.0) * (b2_y2 - b2_y1 + 1.0)
    iou = inter / (a1 + a2 - inter + 1e-16)

    # noobj raw sums (responsible cell subtracted in the JAX epilogue)
    m = (iou <= thresh).astype(jnp.float32)
    noobj_sumsq = jnp.sum(conf * conf * m, axis=1, keepdims=True)   # (R, 1)
    noobj_count = jnp.sum(m, axis=1, keepdims=True)                 # (R, 1)

    # vectorized gather of the responsible cell (same cell for every anchor of
    # a batch; the epilogue selects the best-anchor row)
    k_iota = lax.broadcasted_iota(jnp.int32, iou.shape, 1)
    onehot = (k_iota == kobj_ref[:, 0:1]).astype(jnp.float32)       # (R, nHW)

    def gather(v):
        return jnp.sum(v * onehot, axis=1, keepdims=True)           # (R, 1)

    out_ref[...] = jnp.concatenate(
        [gather(sig_x), gather(sig_y), gather(wr), gather(hr),
         gather(conf), gather(iou), noobj_sumsq, noobj_count], axis=1)


def _choose_b_tile(nB, nA, nHW, target_bytes=2 << 20):
    """Largest batch tile whose block is legal ((B_TILE*nA) % 8 == 0 or full)
    and whose per-tile VMEM footprint (pred 5*nHW + anchor table 2*nHW lanes
    per row, before double-buffering) fits a conservative budget."""
    legal = [bt for bt in range(1, nB + 1)
             if nB % bt == 0 and ((bt * nA) % 8 == 0 or bt == nB)]
    block_bytes = lambda bt: bt * nA * 7 * nHW * 4
    fitting = [bt for bt in legal if block_bytes(bt) <= target_bytes]
    return max(fitting) if fitting else min(legal)


def region_loss(output_nchw, targets, anchors,
                noobject_scale=1.0, object_scale=5.0, thresh=0.6):
    """Forward of RegionLoss.  output_nchw: (nB, nA*5, nH, nW); targets: (nB, 4)."""
    nB, C, nH, nW = output_nchw.shape
    nA = anchors.shape[0]
    assert C == nA * 5
    nHW = nH * nW

    targets = targets.astype(jnp.float32)
    anchors = anchors.astype(jnp.float32)

    # ---- tiny O(nB)/O(nHW) precompute (scalar-prefetch style index math) ----
    wh = jnp.array([nW, nH, nW, nH], jnp.float32)
    gt = targets * wh                        # (nB, 4) [gx, gy, gw, gh] in grid units
    gx, gy, gw, gh = gt[:, 0], gt[:, 1], gt[:, 2], gt[:, 3]

    # best anchor per batch (wh-only IoU, as bbox_anchor_iou)
    aw_r = anchors[None, :, 0]
    ah_r = anchors[None, :, 1]
    inter_a = jnp.minimum(gw[:, None], aw_r) * jnp.minimum(gh[:, None], ah_r)
    union_a = gw[:, None] * gh[:, None] + 1e-16 + aw_r * ah_r - inter_a
    best_n = jnp.argmax(inter_a / union_a, axis=1)               # (nB,)

    # responsible cell (.long() truncation; clamped for safety at target==1.0)
    gi = jnp.clip(gx.astype(jnp.int32), 0, nW - 1)
    gj = jnp.clip(gy.astype(jnp.int32), 0, nH - 1)
    kobj = gj * nW + gi                                          # (nB,)

    # ---- kernel operands ----
    B_TILE = _choose_b_tile(nB, nA, nHW)
    R = B_TILE * nA
    grid = (nB // B_TILE,)

    pred2d = output_nchw.astype(jnp.float32).reshape(nB * nA, 5 * nHW)  # free reshape
    gt_rows = jnp.repeat(gt, nA, axis=0)                                # (nB*nA, 4)
    kobj_rows = jnp.repeat(kobj, nA).astype(jnp.int32)[:, None]         # (nB*nA, 1)

    k = jnp.arange(nHW, dtype=jnp.int32)
    cell_xy = jnp.stack([(k % nW).astype(jnp.float32),
                         (k // nW).astype(jnp.float32)], axis=0)        # (2, nHW)

    # Per-lane anchor table replicating the torch broadcast exactly:
    # anchors[:,0].repeat(nB,1).repeat(1,1,nHW).view(-1) ->
    # anchor at flat position p = a*nHW + k is anchors[(a*nHW + k) % nA].
    a_idx = jnp.arange(nA, dtype=jnp.int32)[:, None]                    # (nA, 1)
    sel = (a_idx * nHW + k[None, :]) % nA                               # (nA, nHW)
    anch_lane = jnp.concatenate([anchors[sel, 0], anchors[sel, 1]], axis=1)  # (nA, 2*nHW)
    anch_rows = jnp.tile(anch_lane, (B_TILE, 1))                        # (R, 2*nHW)

    kernel = functools.partial(_region_loss_kernel, nHW=nHW, thresh=float(thresh))

    stats = pl.pallas_call(
        kernel,
        out_shape=jax.ShapeDtypeStruct((nB * nA, 8), jnp.float32),
        grid=grid,
        in_specs=[
            pl.BlockSpec((R, 5 * nHW), lambda i: (i, 0)),   # predictions (per tile)
            pl.BlockSpec((R, 4), lambda i: (i, 0)),         # GT box per row
            pl.BlockSpec((R, 1), lambda i: (i, 0)),         # responsible cell per row
            pl.BlockSpec((2, nHW), lambda i: (0, 0)),       # cell col/row table (resident)
            pl.BlockSpec((R, 2 * nHW), lambda i: (0, 0)),   # per-lane anchor w/h (resident)
        ],
        out_specs=pl.BlockSpec((R, 8), lambda i: (i, 0)),
        compiler_params=pltpu.CompilerParams(
            dimension_semantics=("parallel",),
            vmem_limit_bytes=32 * 1024 * 1024),
    )(pred2d, gt_rows, kobj_rows, cell_xy, anch_rows)

    # ---- O(nB) epilogue: assemble the loss exactly as the torch module ----
    stats = stats.reshape(nB, nA, 8)
    pick = (jnp.arange(nA)[None, :] == best_n[:, None]).astype(jnp.float32)

    def sel_col(c):
        return jnp.sum(stats[:, :, c] * pick, axis=1)        # (nB,)

    sig_x_o = sel_col(0)      # sigmoid(x) at the responsible cell / best anchor
    sig_y_o = sel_col(1)
    w_o = sel_col(2)          # raw w, h (torch uses raw values in loss_w/h)
    h_o = sel_col(3)
    conf_o = sel_col(4)       # sigmoid(conf)
    iou_o = sel_col(5)        # IoU of the responsible pred box vs. GT
    noobj_sumsq = jnp.sum(stats[:, :, 6])
    noobj_count = jnp.sum(stats[:, :, 7])

    # targets tw/th use the *correct* per-anchor values (anchors[best_n]),
    # exactly as torch build_targets does.
    aw_b = jnp.sum(anchors[None, :, 0] * pick, axis=1)
    ah_b = jnp.sum(anchors[None, :, 1] * pick, axis=1)

    tx = gx - jnp.floor(gx)
    ty = gy - jnp.floor(gy)
    tw_t = jnp.log(gw / aw_b + 1e-16)
    th_t = jnp.log(gh / ah_b + 1e-16)
    scale = 2.0 - targets[:, 2] * targets[:, 3]

    # MSELoss over the nB obj-masked elements == mean of per-batch squared errors
    loss_x = jnp.mean((sig_x_o * scale - tx * scale) ** 2)
    loss_y = jnp.mean((sig_y_o * scale - ty * scale) ** 2)
    loss_w = jnp.mean((w_o * scale - tw_t * scale) ** 2)
    loss_h = jnp.mean((h_o * scale - th_t * scale) ** 2)
    loss_conf_obj = jnp.mean((conf_o - 1.0) ** 2)

    # remove the responsible cell from the noobj statistics (it was counted in
    # the kernel's raw sums only when its IoU <= thresh)
    excl = (iou_o <= thresh).astype(jnp.float32)
    noobj_sumsq = noobj_sumsq - jnp.sum(excl * conf_o * conf_o)
    noobj_count = noobj_count - jnp.sum(excl)

    loss_conf = (object_scale * loss_conf_obj +
                 noobject_scale * (noobj_sumsq / noobj_count))
    loss = loss_x + loss_y + loss_w + loss_h + loss_conf

    recall50 = jnp.mean((iou_o > 0.5).astype(jnp.float32))
    recall75 = jnp.mean((iou_o > 0.75).astype(jnp.float32))
    avg_iou = jnp.mean(iou_o)
    # TODO(synk): the torch module's host-side print of the loss breakdown is
    # intentionally omitted (only "KERNEL_OK" is printed per the spec).
    return loss, recall50, recall75, avg_iou


if __name__ == "__main__":
    key = jax.random.PRNGKey(0)
    k1, k2 = jax.random.split(key)

    nB, nA, nH, nW = 2, 2, 16, 16

    # Deterministic "module parameters": the default anchors from __init__.
    anchors = jnp.array([[1.4940052559648322, 2.3598481287086823],
                         [4.0113013115312155, 5.760873975661669]], jnp.float32)

    # Conv output (NCHW) and normalized GT boxes (cx, cy, w, h) in (0, 1).
    output = 0.5 * jax.random.normal(k1, (nB, nA * 5, nH, nW), jnp.float32)
    t = jax.random.uniform(k2, (nB, 4), jnp.float32)
    targets = jnp.stack([0.1 + 0.8 * t[:, 0],
                         0.1 + 0.8 * t[:, 1],
                         0.1 + 0.4 * t[:, 2],
                         0.1 + 0.4 * t[:, 3]], axis=1)

    loss, r50, r75, aiou = region_loss(output, targets, anchors)
    jax.block_until_ready((loss, r50, r75, aiou))
    print("KERNEL_OK")
</pallas_src>

<mosaic_0001>
module attributes {stable_mosaic.version = 11 : i64} {
  func.func @_region_loss_kernel(%arg0: i32, %arg1: memref<4x1280xf32, #tpu.memory_space<vmem>>, %arg2: memref<4x4xf32, #tpu.memory_space<vmem>>, %arg3: memref<4x1xi32, #tpu.memory_space<vmem>>, %arg4: memref<2x256xf32, #tpu.memory_space<vmem>>, %arg5: memref<4x512xf32, #tpu.memory_space<vmem>>, %arg6: memref<4x8xf32, #tpu.memory_space<vmem>>) attributes {dimension_semantics = [#tpu.dimension_semantics<parallel>], iteration_bounds = array<i64: 1>, scalar_prefetch = 0 : i64, scratch_operands = 0 : i64, tpu.core_type = #tpu.core_type<tc>, window_params = [{transform_indices = @transform_0, window_bounds = array<i64: 4, 1280>}, {transform_indices = @transform_1, window_bounds = array<i64: 4, 4>}, {transform_indices = @transform_2, window_bounds = array<i64: 4, 1>}, {pipeline_mode = #tpu.pipeline_mode<synchronous>, transform_indices = @transform_3, window_bounds = array<i64: 2, 256>}, {pipeline_mode = #tpu.pipeline_mode<synchronous>, transform_indices = @transform_4, window_bounds = array<i64: 4, 512>}, {transform_indices = @transform_5, window_bounds = array<i64: 4, 8>}]} {
    %c0 = arith.constant 0 : index
    %c0_0 = arith.constant 0 : index
    %0 = vector.load %arg1[%c0, %c0_0] : memref<4x1280xf32, #tpu.memory_space<vmem>>, vector<4x256xf32>
    %c0_1 = arith.constant 0 : index
    %c256 = arith.constant 256 : index
    %1 = vector.load %arg1[%c0_1, %c256] : memref<4x1280xf32, #tpu.memory_space<vmem>>, vector<4x256xf32>
    %c0_2 = arith.constant 0 : index
    %c512 = arith.constant 512 : index
    %2 = vector.load %arg1[%c0_2, %c512] : memref<4x1280xf32, #tpu.memory_space<vmem>>, vector<4x256xf32>
    %c0_3 = arith.constant 0 : index
    %c768 = arith.constant 768 : index
    %3 = vector.load %arg1[%c0_3, %c768] : memref<4x1280xf32, #tpu.memory_space<vmem>>, vector<4x256xf32>
    %c0_4 = arith.constant 0 : index
    %c1024 = arith.constant 1024 : index
    %4 = vector.load %arg1[%c0_4, %c1024] : memref<4x1280xf32, #tpu.memory_space<vmem>>, vector<4x256xf32>
    %c0_5 = arith.constant 0 : index
    %c0_6 = arith.constant 0 : index
    %5 = vector.load %arg4[%c0_5, %c0_6] : memref<2x256xf32, #tpu.memory_space<vmem>>, vector<1x256xf32>
    %c1 = arith.constant 1 : index
    %c0_7 = arith.constant 0 : index
    %6 = vector.load %arg4[%c1, %c0_7] : memref<2x256xf32, #tpu.memory_space<vmem>>, vector<1x256xf32>
    %c0_8 = arith.constant 0 : index
    %c0_9 = arith.constant 0 : index
    %7 = vector.load %arg5[%c0_8, %c0_9] : memref<4x512xf32, #tpu.memory_space<vmem>>, vector<4x256xf32>
    %c0_10 = arith.constant 0 : index
    %c256_11 = arith.constant 256 : index
    %8 = vector.load %arg5[%c0_10, %c256_11] : memref<4x512xf32, #tpu.memory_space<vmem>>, vector<4x256xf32>
    %c0_12 = arith.constant 0 : index
    %c0_13 = arith.constant 0 : index
    %9 = vector.load %arg2[%c0_12, %c0_13] : memref<4x4xf32, #tpu.memory_space<vmem>>, vector<4x1xf32>
    %c0_14 = arith.constant 0 : index
    %c1_15 = arith.constant 1 : index
    %10 = vector.load %arg2[%c0_14, %c1_15] : memref<4x4xf32, #tpu.memory_space<vmem>>, vector<4x1xf32>
    %c0_16 = arith.constant 0 : index
    %c2 = arith.constant 2 : index
    %11 = vector.load %arg2[%c0_16, %c2] : memref<4x4xf32, #tpu.memory_space<vmem>>, vector<4x1xf32>
    %c0_17 = arith.constant 0 : index
    %c3 = arith.constant 3 : index
    %12 = vector.load %arg2[%c0_17, %c3] : memref<4x4xf32, #tpu.memory_space<vmem>>, vector<4x1xf32>
    %13 = arith.negf %0 : vector<4x256xf32>
    %14 = math.exp %13 : vector<4x256xf32>
    %cst = arith.constant 1.000000e+00 : f32
    %15 = vector.broadcast %cst : f32 to vector<4x256xf32>
    %16 = arith.addf %15, %14 : vector<4x256xf32>
    %17 = arith.divf %15, %16 : vector<4x256xf32>
    %18 = arith.negf %1 : vector<4x256xf32>
    %19 = math.exp %18 : vector<4x256xf32>
    %cst_18 = arith.constant 1.000000e+00 : f32
    %20 = vector.broadcast %cst_18 : f32 to vector<4x256xf32>
    %21 = arith.addf %20, %19 : vector<4x256xf32>
    %22 = arith.divf %20, %21 : vector<4x256xf32>
    %23 = arith.negf %4 : vector<4x256xf32>
    %24 = math.exp %23 : vector<4x256xf32>
    %cst_19 = arith.constant 1.000000e+00 : f32
    %25 = vector.broadcast %cst_19 : f32 to vector<4x256xf32>
    %26 = arith.addf %25, %24 : vector<4x256xf32>
    %27 = arith.divf %25, %26 : vector<4x256xf32>
    %28 = vector.broadcast %5 : vector<1x256xf32> to vector<4x256xf32>
    %29 = arith.addf %17, %28 : vector<4x256xf32>
    %30 = vector.broadcast %6 : vector<1x256xf32> to vector<4x256xf32>
    %31 = arith.addf %22, %30 : vector<4x256xf32>
    %32 = math.exp %2 : vector<4x256xf32>
    %33 = arith.mulf %32, %7 : vector<4x256xf32>
    %34 = math.exp %3 : vector<4x256xf32>
    %35 = arith.mulf %34, %8 : vector<4x256xf32>
    %cst_20 = arith.constant 5.000000e-01 : f32
    %36 = vector.broadcast %cst_20 : f32 to vector<4x256xf32>
    %37 = arith.mulf %36, %33 : vector<4x256xf32>
    %38 = arith.subf %29, %37 : vector<4x256xf32>
    %cst_21 = arith.constant 5.000000e-01 : f32
    %39 = vector.broadcast %cst_21 : f32 to vector<4x256xf32>
    %40 = arith.mulf %39, %33 : vector<4x256xf32>
    %41 = arith.addf %29, %40 : vector<4x256xf32>
    %cst_22 = arith.constant 5.000000e-01 : f32
    %42 = vector.broadcast %cst_22 : f32 to vector<4x256xf32>
    %43 = arith.mulf %42, %35 : vector<4x256xf32>
    %44 = arith.subf %31, %43 : vector<4x256xf32>
    %cst_23 = arith.constant 5.000000e-01 : f32
    %45 = vector.broadcast %cst_23 : f32 to vector<4x256xf32>
    %46 = arith.mulf %45, %35 : vector<4x256xf32>
    %47 = arith.addf %31, %46 : vector<4x256xf32>
    %cst_24 = arith.constant 5.000000e-01 : f32
    %48 = vector.broadcast %cst_24 : f32 to vector<4x1xf32>
    %49 = arith.mulf %48, %11 : vector<4x1xf32>
    %50 = arith.subf %9, %49 : vector<4x1xf32>
    %cst_25 = arith.constant 5.000000e-01 : f32
    %51 = vector.broadcast %cst_25 : f32 to vector<4x1xf32>
    %52 = arith.mulf %51, %11 : vector<4x1xf32>
    %53 = arith.addf %9, %52 : vector<4x1xf32>
    %cst_26 = arith.constant 5.000000e-01 : f32
    %54 = vector.broadcast %cst_26 : f32 to vector<4x1xf32>
    %55 = arith.mulf %54, %12 : vector<4x1xf32>
    %56 = arith.subf %10, %55 : vector<4x1xf32>
    %cst_27 = arith.constant 5.000000e-01 : f32
    %57 = vector.broadcast %cst_27 : f32 to vector<4x1xf32>
    %58 = arith.mulf %57, %12 : vector<4x1xf32>
    %59 = arith.addf %10, %58 : vector<4x1xf32>
    %60 = vector.broadcast %53 : vector<4x1xf32> to vector<4x256xf32>
    %61 = arith.minimumf %41, %60 : vector<4x256xf32>
    %62 = vector.broadcast %50 : vector<4x1xf32> to vector<4x256xf32>
    %63 = arith.maximumf %38, %62 : vector<4x256xf32>
    %64 = arith.subf %61, %63 : vector<4x256xf32>
    %cst_28 = arith.constant 1.000000e+00 : f32
    %65 = vector.broadcast %cst_28 : f32 to vector<4x256xf32>
    %66 = arith.addf %64, %65 : vector<4x256xf32>
    %cst_29 = arith.constant 0.000000e+00 : f32
    %67 = vector.broadcast %cst_29 : f32 to vector<4x256xf32>
    %68 = arith.maximumf %66, %67 : vector<4x256xf32>
    %69 = vector.broadcast %59 : vector<4x1xf32> to vector<4x256xf32>
    %70 = arith.minimumf %47, %69 : vector<4x256xf32>
    %71 = vector.broadcast %56 : vector<4x1xf32> to vector<4x256xf32>
    %72 = arith.maximumf %44, %71 : vector<4x256xf32>
    %73 = arith.subf %70, %72 : vector<4x256xf32>
    %cst_30 = arith.constant 1.000000e+00 : f32
    %74 = vector.broadcast %cst_30 : f32 to vector<4x256xf32>
    %75 = arith.addf %73, %74 : vector<4x256xf32>
    %cst_31 = arith.constant 0.000000e+00 : f32
    %76 = vector.broadcast %cst_31 : f32 to vector<4x256xf32>
    %77 = arith.maximumf %75, %76 : vector<4x256xf32>
    %78 = arith.mulf %68, %77 : vector<4x256xf32>
    %79 = arith.subf %41, %38 : vector<4x256xf32>
    %cst_32 = arith.constant 1.000000e+00 : f32
    %80 = vector.broadcast %cst_32 : f32 to vector<4x256xf32>
    %81 = arith.addf %79, %80 : vector<4x256xf32>
    %82 = arith.subf %47, %44 : vector<4x256xf32>
    %cst_33 = arith.constant 1.000000e+00 : f32
    %83 = vector.broadcast %cst_33 : f32 to vector<4x256xf32>
    %84 = arith.addf %82, %83 : vector<4x256xf32>
    %85 = arith.mulf %81, %84 : vector<4x256xf32>
    %86 = arith.subf %53, %50 : vector<4x1xf32>
    %cst_34 = arith.constant 1.000000e+00 : f32
    %87 = vector.broadcast %cst_34 : f32 to vector<4x1xf32>
    %88 = arith.addf %86, %87 : vector<4x1xf32>
    %89 = arith.subf %59, %56 : vector<4x1xf32>
    %cst_35 = arith.constant 1.000000e+00 : f32
    %90 = vector.broadcast %cst_35 : f32 to vector<4x1xf32>
    %91 = arith.addf %89, %90 : vector<4x1xf32>
    %92 = arith.mulf %88, %91 : vector<4x1xf32>
    %93 = vector.broadcast %92 : vector<4x1xf32> to vector<4x256xf32>
    %94 = arith.addf %85, %93 : vector<4x256xf32>
    %95 = arith.subf %94, %78 : vector<4x256xf32>
    %cst_36 = arith.constant 1.000000e-16 : f32
    %96 = vector.broadcast %cst_36 : f32 to vector<4x256xf32>
    %97 = arith.addf %95, %96 : vector<4x256xf32>
    %98 = arith.divf %78, %97 : vector<4x256xf32>
    %cst_37 = arith.constant 6.000000e-01 : f32
    %99 = vector.broadcast %cst_37 : f32 to vector<4x256xf32>
    %100 = arith.cmpf ole, %98, %99 : vector<4x256xf32>
    %101 = arith.extui %100 : vector<4x256xi1> to vector<4x256xi32>
    %102 = arith.sitofp %101 : vector<4x256xi32> to vector<4x256xf32>
    %103 = arith.mulf %27, %27 : vector<4x256xf32>
    %104 = arith.mulf %103, %102 : vector<4x256xf32>
    %cst_38 = arith.constant dense<0.000000e+00> : vector<4xf32>
    %105 = vector.multi_reduction <add>, %104, %cst_38 [1] : vector<4x256xf32> to vector<4xf32>
    %106 = vector.shape_cast %105 : vector<4xf32> to vector<4x1xf32>
    %cst_39 = arith.constant dense<0.000000e+00> : vector<4xf32>
    %107 = vector.multi_reduction <add>, %102, %cst_39 [1] : vector<4x256xf32> to vector<4xf32>
    %108 = vector.shape_cast %107 : vector<4xf32> to vector<4x1xf32>
    %109 = tpu.iota {dimensions = array<i32: 1>} : vector<4x256xi32>
    %c0_40 = arith.constant 0 : index
    %c0_41 = arith.constant 0 : index
    %110 = vector.load %arg3[%c0_40, %c0_41] : memref<4x1xi32, #tpu.memory_space<vmem>>, vector<4x1xi32>
    %111 = vector.broadcast %110 : vector<4x1xi32> to vector<4x256xi32>
    %112 = arith.cmpi eq, %109, %111 : vector<4x256xi32>
    %113 = arith.extui %112 : vector<4x256xi1> to vector<4x256xi32>
    %114 = arith.sitofp %113 : vector<4x256xi32> to vector<4x256xf32>
    %115 = arith.mulf %17, %114 : vector<4x256xf32>
    %cst_42 = arith.constant dense<0.000000e+00> : vector<4xf32>
    %116 = vector.multi_reduction <add>, %115, %cst_42 [1] : vector<4x256xf32> to vector<4xf32>
    %117 = vector.shape_cast %116 : vector<4xf32> to vector<4x1xf32>
    %118 = arith.mulf %22, %114 : vector<4x256xf32>
    %cst_43 = arith.constant dense<0.000000e+00> : vector<4xf32>
    %119 = vector.multi_reduction <add>, %118, %cst_43 [1] : vector<4x256xf32> to vector<4xf32>
    %120 = vector.shape_cast %119 : vector<4xf32> to vector<4x1xf32>
    %121 = arith.mulf %2, %114 : vector<4x256xf32>
    %cst_44 = arith.constant dense<0.000000e+00> : vector<4xf32>
    %122 = vector.multi_reduction <add>, %121, %cst_44 [1] : vector<4x256xf32> to vector<4xf32>
    %123 = vector.shape_cast %122 : vector<4xf32> to vector<4x1xf32>
    %124 = arith.mulf %3, %114 : vector<4x256xf32>
    %cst_45 = arith.constant dense<0.000000e+00> : vector<4xf32>
    %125 = vector.multi_reduction <add>, %124, %cst_45 [1] : vector<4x256xf32> to vector<4xf32>
    %126 = vector.shape_cast %125 : vector<4xf32> to vector<4x1xf32>
    %127 = arith.mulf %27, %114 : vector<4x256xf32>
    %cst_46 = arith.constant dense<0.000000e+00> : vector<4xf32>
    %128 = vector.multi_reduction <add>, %127, %cst_46 [1] : vector<4x256xf32> to vector<4xf32>
    %129 = vector.shape_cast %128 : vector<4xf32> to vector<4x1xf32>
    %130 = arith.mulf %98, %114 : vector<4x256xf32>
    %cst_47 = arith.constant dense<0.000000e+00> : vector<4xf32>
    %131 = vector.multi_reduction <add>, %130, %cst_47 [1] : vector<4x256xf32> to vector<4xf32>
    %132 = vector.shape_cast %131 : vector<4xf32> to vector<4x1xf32>
    %133 = tpu.concatenate %117, %120, %123, %126, %129, %132, %106, %108 in 1 : vector<4x1xf32>, vector<4x1xf32>, vector<4x1xf32>, vector<4x1xf32>, vector<4x1xf32>, vector<4x1xf32>, vector<4x1xf32>, vector<4x1xf32> -> vector<4x8xf32>
    %c0_48 = arith.constant 0 : index
    %c0_49 = arith.constant 0 : index
    %134 = vector.load %arg6[%c0_48, %c0_49] : memref<4x8xf32, #tpu.memory_space<vmem>>, vector<4x8xf32>
    tpu.vector_store %arg6[%c0_48, %c0_49], %133 {strides = array<i32>} : memref<4x8xf32, #tpu.memory_space<vmem>>, vector<4x8xf32>,
    return
  }
  func.func @transform_0(%arg0: i32) -> (i32, i32) {
    %c0_i32 = arith.constant 0 : i32
    %c0_i32_0 = arith.constant 0 : i32
    return %arg0, %c0_i32 : i32, i32
  }
  func.func @transform_1(%arg0: i32) -> (i32, i32) {
    %c0_i32 = arith.constant 0 : i32
    %c0_i32_0 = arith.constant 0 : i32
    return %arg0, %c0_i32 : i32, i32
  }
  func.func @transform_2(%arg0: i32) -> (i32, i32) {
    %c0_i32 = arith.constant 0 : i32
    %c0_i32_0 = arith.constant 0 : i32
    return %arg0, %c0_i32 : i32, i32
  }
  func.func @transform_3(%arg0: i32) -> (i32, i32) {
    %c0_i32 = arith.constant 0 : i32
    %c0_i32_0 = arith.constant 0 : i32
    %c0_i32_1 = arith.constant 0 : i32
    return %c0_i32, %c0_i32_0 : i32, i32
  }
  func.func @transform_4(%arg0: i32) -> (i32, i32) {
    %c0_i32 = arith.constant 0 : i32
    %c0_i32_0 = arith.constant 0 : i32
    %c0_i32_1 = arith.constant 0 : i32
    return %c0_i32, %c0_i32_0 : i32, i32
  }
  func.func @transform_5(%arg0: i32) -> (i32, i32) {
    %c0_i32 = arith.constant 0 : i32
    %c0_i32_0 = arith.constant 0 : i32
    return %arg0, %c0_i32 : i32, i32
  }
}

</mosaic_0001>

<llo_original>
// kernel: tpu_custom_call.1
$region0: #{tpu_custom_call.1}
  #allocation0 [shape = 'u32[]', space=smem, size = 0x4, offset = 0x4, fixed_abs, tag = 'smem constant byte address 0x4 - core index']
  #allocation1 [shape = 'u32[144,128]{1,0:T(1,128)}', space=vmem, size = 0x12000, scoped, tag = 'internal scratch']
  %s0 = inlined_call_operand.hbm [shape: f32[4,1280], index: 0, kind: input, shape index: {}]
  %s1 = inlined_call_operand.vmem [shape: f32[4,4], index: 1, kind: input, shape index: {}]
  %s2 = inlined_call_operand.vmem [shape: s32[4,1], index: 2, kind: input, shape index: {}]
  %s3 = inlined_call_operand.hbm [shape: f32[2,256], index: 3, kind: input, shape index: {}]
  %s4 = inlined_call_operand.vmem [shape: f32[4,512], index: 4, kind: input, shape index: {}]
  %s5 = inlined_call_operand.hbm [shape: f32[4,8], index: 5, kind: output, shape index: {}]
  %s6 = sld [smem:[#allocation0]]
  $region38: #{tpu_custom_call.1} parent=0
    _
  %s8 = ssub.s32 1, %s6
  %s9 = scalar_select 0, %s8, %s6
  $region1: #{tpu_custom_call.1} parent=0
    #allocation2 [shape = 'u8[20480]{0}', space=vmem, size = 0x5000, scoped, tag = 'input window, operand 0, single buffered']
    #allocation3 [shape = 's32[1]{0}', space=sflag, size = 0x4, scoped, tag = 'scoped memory for tpu_custom_call.1']
    #allocation4 [shape = 's32[1]{0}', space=sflag, size = 0x4, scoped, tag = 'scoped memory for tpu_custom_call.1']
    #allocation5 [shape = 'u8[2048]{0}', space=vmem, size = 0x800, scoped, tag = 'input window, operand 3, single buffered']
    #allocation6 [shape = 's32[1]{0}', space=sflag, size = 0x4, scoped, tag = 'scoped memory for tpu_custom_call.1']
    #allocation7 [shape = 'u8[2048]{0}', space=vmem, size = 0x800, scoped, tag = 'output window, operand 0, single buffered']
    %10 = vsyncpa [#allocation3], 0
    %11 = vsyncpa [#allocation6], 0
    %12 = vsyncpa [#allocation4], 0
    // Predicated region
    $region2: #{tpu_custom_call.1} parent=1 // pred_check
      _
    $region3: #{tpu_custom_call.1} parent=1 // pred_check_branch
      %14 = sbr.rel (0) target = $region5
    $region4: #{tpu_custom_call.1} parent=1 // pred_region
      %s16 = ssub.s32 640, 640
      %17 = vsyncadd [#allocation3], %s16
      %s19 = sshll.u32 [#allocation2], 4
      %s20 = int_to_ptr.vmem [resolvable:$true] %s19
      %22 = dma.hbm_to_vmem [thread:$0]  %s0, 640, %s20, [#allocation3]
    $region5: #{tpu_custom_call.1} parent=1 // pred_fallthru
      _
    // Predicated region
    $region6: #{tpu_custom_call.1} parent=1 // pred_check
      _
    $region7: #{tpu_custom_call.1} parent=1 // pred_check_branch
      %24 = sbr.rel (0) target = $region9
    $region8: #{tpu_custom_call.1} parent=1 // pred_region
      _
    $region9: #{tpu_custom_call.1} parent=1 // pred_fallthru
      _
    // Predicated region
    $region10: #{tpu_custom_call.1} parent=1 // pred_check
      _
    $region11: #{tpu_custom_call.1} parent=1 // pred_check_branch
      %26 = sbr.rel (0) target = $region13
    $region12: #{tpu_custom_call.1} parent=1 // pred_region
      _
    $region13: #{tpu_custom_call.1} parent=1 // pred_fallthru
      _
    // Predicated region
    $region14: #{tpu_custom_call.1} parent=1 // pred_check
      _
    $region15: #{tpu_custom_call.1} parent=1 // pred_check_branch
      %28 = sbr.rel (0) target = $region17
    $region16: #{tpu_custom_call.1} parent=1 // pred_region
      %s30 = ssub.s32 64, 64
      %31 = vsyncadd [#allocation6], %s30
      %s33 = sshll.u32 [#allocation5], 4
      %s34 = int_to_ptr.vmem [resolvable:$true] %s33
      %36 = dma.hbm_to_vmem [thread:$0]  %s3, 64, %s34, [#allocation6]
    $region17: #{tpu_custom_call.1} parent=1 // pred_fallthru
      _
    // Predicated region
    $region18: #{tpu_custom_call.1} parent=1 // pred_check
      _
    $region19: #{tpu_custom_call.1} parent=1 // pred_check_branch
      %38 = sbr.rel (0) target = $region21
    $region20: #{tpu_custom_call.1} parent=1 // pred_region
      _
    $region21: #{tpu_custom_call.1} parent=1 // pred_fallthru
      _
    // Predicated region
    $region22: #{tpu_custom_call.1} parent=1 // pred_check
      _
    $region23: #{tpu_custom_call.1} parent=1 // pred_check_branch
      %40 = sbr.rel (0) target = $region25
    $region24: #{tpu_custom_call.1} parent=1 // pred_region
      %41 = dma.done [#allocation3], 640
    $region25: #{tpu_custom_call.1} parent=1 // pred_fallthru
      _
    // Predicated region
    $region26: #{tpu_custom_call.1} parent=1 // pred_check
      _
    $region27: #{tpu_custom_call.1} parent=1 // pred_check_branch
      %43 = sbr.rel (0) target = $region29
    $region28: #{tpu_custom_call.1} parent=1 // pred_region
      %44 = dma.done [#allocation6], 64
    $region29: #{tpu_custom_call.1} parent=1 // pred_fallthru
      _
    %v45 = vld [vmem:[#allocation2] sm:$0xff]
    %v46 = vld [vmem:[#allocation2 + $0x8] sm:$0xff]
    %v47 = vld [vmem:[#allocation2 + $0x10] sm:$0xff]
    %v48 = vld [vmem:[#allocation2 + $0x18] sm:$0xff]
    %v49 = vld [vmem:[#allocation2 + $0x20] sm:$0xff]
    %v50 = vld [vmem:[#allocation5] ss:$2 sm:$0x3]
    %s51 = scalar_lea.vmem [#allocation5], 1
    %v52 = vld [vmem:[%s51] ss:$2 sm:$0x3]
    %v53 = vld [vmem:[%s4] sm:$0xff]
    %v54 = vld [vmem:[%s4 + $0x8] sm:$0xff]
    %v55 = vld [vmem:[%s1] sm:$0xf]
    %v56 = vxor.u32 %v45, 2147483648
    %v57 = vmul.f32 %v56, 1.442695
    %v58 = vpow.pop %v57
    %v59 = vadd.f32 %v58, 1.0
    %v60 = vrcp.pop %v59
    %v61 = vmul.f32 1.0, %v60
    %v62 = vxor.u32 %v46, 2147483648
    %v63 = vmul.f32 %v62, 1.442695
    %v64 = vpow.pop %v63
    %v65 = vadd.f32 %v64, 1.0
    %v66 = vrcp.pop %v65
    %v67 = vmul.f32 1.0, %v66
    %v68 = vxor.u32 %v49, 2147483648
    %v69 = vmul.f32 %v68, 1.442695
    %v70 = vpow.pop %v69
    %v71 = vadd.f32 %v70, 1.0
    %v72 = vrcp.pop %v71
    %v73 = vmul.f32 1.0, %v72
    %v75 = vlaneseq
    %v76 = vshrl.u32 %v75, 7
    %v77 = vsub.s32 0, %v76
    %v78 = vrot.slane %v50, %v77
    %v79 = vlaneseq
    %v80 = vshrl.u32 %v79, 7
    %v81 = vsub.s32 1, %v80
    %v82 = vrot.slane %v50, %v81
    %v83 = vcombine.low %v78, %v82
    %v85 = vadd.f32 %v61, %v83
    %v87 = vlaneseq
    %v88 = vshrl.u32 %v87, 7
    %v89 = vsub.s32 0, %v88
    %v90 = vrot.slane %v52, %v89
    %v91 = vlaneseq
    %v92 = vshrl.u32 %v91, 7
    %v93 = vsub.s32 1, %v92
    %v94 = vrot.slane %v52, %v93
    %v95 = vcombine.low %v90, %v94
    %v97 = vadd.f32 %v67, %v95
    %v98 = vmul.f32 %v47, 1.442695
    %v99 = vpow.pop %v98
    %v100 = vmul.f32 %v99, %v53
    %v101 = vmul.f32 %v48, 1.442695
    %v102 = vpow.pop %v101
    %v103 = vmul.f32 %v102, %v54
    %v104 = vmul.f32 %v100, 0.5
    %v105 = vsub.f32 %v85, %v104
    %v106 = vadd.f32 %v85, %v104
    %v107 = vmul.f32 %v103, 0.5
    %v108 = vsub.f32 %v97, %v107
    %v109 = vadd.f32 %v97, %v107
    %v110 = vmul.f32 %v55, 0.5
    %112 = vrot.lane.b32.xlu0 %v110, 126
    %v113 = vpop.permute.xlu0 %112
    %v115 = vsub.f32 %v55, %v113
    %v116 = vadd.f32 %v55, %v113
    %118 = vset.pattern.permute.xlu0 0
    %119 = vperm.xlu0 %118, %v116
    %v120 = vpop.permute.xlu0 %119
    %v122 = vunpack.c.l.s4 839922192
    %v123 = vunpack.c.0.s8 %v122
    %v124 = vlaneseq
    %v125 = vshrl.u32 %v124, 7
    %v126 = vsub.s32 %v123, %v125
    %v127 = vrot.slane %v120, %v126
    %v129 = vmin.f32 %v106, %v127
    %131 = vset.pattern.permute.xlu0 0
    %132 = vperm.xlu0 %131, %v115
    %v133 = vpop.permute.xlu0 %132
    %v135 = vunpack.c.l.s4 839922192
    %v136 = vunpack.c.0.s8 %v135
    %v137 = vlaneseq
    %v138 = vshrl.u32 %v137, 7
    %v139 = vsub.s32 %v136, %v138
    %v140 = vrot.slane %v133, %v139
    %v142 = vmax.f32 %v105, %v140
    %v143 = vsub.f32 %v129, %v142
    %v144 = vadd.f32 %v143, 1.0
    %v145 = vmax.f32 %v144, 0.0
    %146 = vset.pattern.permute.xlu0 1
    %147 = vperm.xlu0 %146, %v116
    %v148 = vpop.permute.xlu0 %147
    %v150 = vunpack.c.l.s4 839922192
    %v151 = vunpack.c.0.s8 %v150
    %v152 = vlaneseq
    %v153 = vshrl.u32 %v152, 7
    %v154 = vsub.s32 %v151, %v153
    %v155 = vrot.slane %v148, %v154
    %v157 = vmin.f32 %v109, %v155
    %158 = vset.pattern.permute.xlu0 1
    %159 = vperm.xlu0 %158, %v115
    %v160 = vpop.permute.xlu0 %159
    %v162 = vunpack.c.l.s4 839922192
    %v163 = vunpack.c.0.s8 %v162
    %v164 = vlaneseq
    %v165 = vshrl.u32 %v164, 7
    %v166 = vsub.s32 %v163, %v165
    %v167 = vrot.slane %v160, %v166
    %v169 = vmax.f32 %v108, %v167
    %v170 = vsub.f32 %v157, %v169
    %v171 = vadd.f32 %v170, 1.0
    %v172 = vmax.f32 %v171, 0.0
    %v173 = vmul.f32 %v145, %v172
    %v174 = vsub.f32 %v106, %v105
    %v175 = vadd.f32 %v174, 1.0
    %v176 = vsub.f32 %v109, %v108
    %v177 = vadd.f32 %v176, 1.0
    %v178 = vmul.f32 %v175, %v177
    %v179 = vsub.f32 %v116, %v115
    %v180 = vadd.f32 %v179, 1.0
    %182 = vrot.lane.b32.xlu0 %v180, 127
    %v183 = vpop.permute.xlu0 %182
    %v185 = vmul.f32 %v180, %v183
    %187 = vset.pattern.permute.xlu0 0
    %188 = vperm.xlu0 %187, %v185
    %v189 = vpop.permute.xlu0 %188
    %v191 = vunpack.c.l.s4 839922192
    %v192 = vunpack.c.0.s8 %v191
    %v193 = vlaneseq
    %v194 = vshrl.u32 %v193, 7
    %v195 = vsub.s32 %v192, %v194
    %v196 = vrot.slane %v189, %v195
    %v198 = vadd.f32 %v178, %v196
    %v199 = vsub.f32 %v198, %v173
    %v200 = vadd.f32 %v199, 1e-16
    %v201 = vrcp.pop %v200
    %v202 = vmul.f32 %v173, %v201
    %vm203 = vcmp.le.f32.partialorder %v202, 0.6
    %v204 = vsel %vm203, 1, 0
    %v205 = vcvt.s32.f32 %v204
    %v206 = vmul.f32 %v73, %v73
    %v207 = vmul.f32 %v206, %v205
    %v209 = vcombine.high %v207, %v207
    %vm211 = vcmask 1043456
    %v212 = vsel %vm211, %v207, 0.0
    %v213 = vsel %vm211, %v209, 0.0
    %v214 = vadd.f32 %v212, %v213
    %215 = vadd.xlane.f32.xlu0 %v214
    %v216 = vpop.xlane.xlu0 %215
    %v218 = vcombine.high %v205, %v205
    %v220 = vsel %vm211, %v205, 0.0
    %v221 = vsel %vm211, %v218, 0.0
    %v222 = vadd.f32 %v220, %v221
    %223 = vadd.xlane.f32.xlu0 %v222
    %v224 = vpop.xlane.xlu0 %223
    %v225 = vlaneseq
    %v226 = vand.u32 %v225, 127
    %v227 = vadd.s32 %v226, 128
    %v228 = vld [vmem:[%s2] sm:$0xf]
    %229 = vset.pattern.permute.xlu0 0
    %230 = vperm.xlu0 %229, %v228
    %v231 = vpop.permute.xlu0 %230
    %vm232 = vcmp.eq.s32.totalorder %v226, %v231
    %vm233 = vcmp.eq.s32.totalorder %v227, %v231
    %v234 = vsel %vm232, 1, 0
    %v235 = vsel %vm233, 1, 0
    %v236 = vcvt.s32.f32 %v234
    %v237 = vcvt.s32.f32 %v235
    %v240 = vcombine.low %v236, %v237
    %v242 = vmul.f32 %v61, %v240
    %v244 = vcombine.high %v242, %v242
    %v246 = vsel %vm211, %v242, 0.0
    %v247 = vsel %vm211, %v244, 0.0
    %v248 = vadd.f32 %v246, %v247
    %249 = vadd.xlane.f32.xlu0 %v248
    %v250 = vpop.xlane.xlu0 %249
    %v251 = vmul.f32 %v67, %v240
    %v253 = vcombine.high %v251, %v251
    %v255 = vsel %vm211, %v251, 0.0
    %v256 = vsel %vm211, %v253, 0.0
    %v257 = vadd.f32 %v255, %v256
    %258 = vadd.xlane.f32.xlu0 %v257
    %v259 = vpop.xlane.xlu0 %258
    %v260 = vmul.f32 %v47, %v240
    %v262 = vcombine.high %v260, %v260
    %v264 = vsel %vm211, %v260, 0.0
    %v265 = vsel %vm211, %v262, 0.0
    %v266 = vadd.f32 %v264, %v265
    %267 = vadd.xlane.f32.xlu0 %v266
    %v268 = vpop.xlane.xlu0 %267
    %v269 = vmul.f32 %v48, %v240
    %v271 = vcombine.high %v269, %v269
    %v273 = vsel %vm211, %v269, 0.0
    %v274 = vsel %vm211, %v271, 0.0
    %v275 = vadd.f32 %v273, %v274
    %276 = vadd.xlane.f32.xlu0 %v275
    %v277 = vpop.xlane.xlu0 %276
    %v278 = vmul.f32 %v73, %v240
    %v280 = vcombine.high %v278, %v278
    %v282 = vsel %vm211, %v278, 0.0
    %v283 = vsel %vm211, %v280, 0.0
    %v284 = vadd.f32 %v282, %v283
    %285 = vadd.xlane.f32.xlu0 %v284
    %v286 = vpop.xlane.xlu0 %285
    %v287 = vmul.f32 %v202, %v240
    %v289 = vcombine.high %v287, %v287
    %v291 = vsel %vm211, %v287, 0.0
    %v292 = vsel %vm211, %v289, 0.0
    %v293 = vadd.f32 %v291, %v292
    %294 = vadd.xlane.f32.xlu0 %v293
    %v295 = vpop.xlane.xlu0 %294
    %vm296 = vcmask 7168
    %v297 = vsel %vm296, %v250, %v259
    %vm298 = vcmask 15360
    %v299 = vsel %vm298, %v297, %v268
    %vm300 = vcmask 23552
    %v301 = vsel %vm300, %v299, %v277
    %vm302 = vcmask 31744
    %v303 = vsel %vm302, %v301, %v286
    %vm304 = vcmask 39936
    %v305 = vsel %vm304, %v303, %v295
    %vm306 = vcmask 48128
    %v307 = vsel %vm306, %v305, %v216
    %vm308 = vcmask 56320
    %v309 = vsel %vm308, %v307, %v224
    %vm310 = vcmask 60416
    %311 = vst.msk [vmem:[#allocation7] sm:$0xf] %vm310, %v309
    // Predicated region
    $region30: #{tpu_custom_call.1} parent=1 // pred_check
      _
    $region31: #{tpu_custom_call.1} parent=1 // pred_check_branch
      %313 = sbr.rel (0) target = $region33
    $region32: #{tpu_custom_call.1} parent=1 // pred_region
      %s315 = ssub.s32 64, 64
      %316 = vsyncadd [#allocation4], %s315
      %s318 = sshll.u32 [#allocation7], 4
      %s319 = int_to_ptr.vmem [resolvable:$true] %s318
      %321 = dma.vmem_to_hbm [thread:$0]  %s319, 64, %s5, [#allocation4]
    $region33: #{tpu_custom_call.1} parent=1 // pred_fallthru
      _
    // Predicated region
    $region34: #{tpu_custom_call.1} parent=1 // pred_check
      _
    $region35: #{tpu_custom_call.1} parent=1 // pred_check_branch
      %323 = sbr.rel (0) target = $region37
    $region36: #{tpu_custom_call.1} parent=1 // pred_region
      %324 = dma.done [#allocation4], 64
    $region37: #{tpu_custom_call.1} parent=1 // pred_fallthru
      _
    %325 = vsyncpa [#allocation3], 1
    %326 = vsyncpa [#allocation6], 1
    %327 = vsyncpa [#allocation4], 1

</llo_original>
